<compile_context>
chip_gen: v5e
topology: v5e:2x2
jax: 0.10.0
libtpu: 0.0.40
codegen_flags: <defaults>
</compile_context>

<pallas_src>
import functools

import jax
import jax.numpy as jnp
from jax.experimental import pallas as pl
from jax.experimental.pallas import tpu as pltpu

LANE = 128     # f32 lane width
SUBLANE = 8    # f32 sublane width


def _round_up(n, m):
    return ((n + m - 1) // m) * m


def _pad2(a, rows, cols):
    return jnp.pad(a, ((0, rows - a.shape[0]), (0, cols - a.shape[1])))


def _mlp_kernel(*refs, num_hidden):
    """Fused MLP: num_hidden x (matmul + bias + relu) followed by output matmul.

    refs = (x_ref, w0, b0, w1, b1, ..., w_out, b_out, o_ref). Everything is a
    single VMEM-resident block for this grid step; all intermediates live in
    vregs/VMEM, f32 accumulation throughout, one cast at the final store.
    """
    x_ref = refs[0]
    o_ref = refs[-1]
    wb = refs[1:-1]

    x = x_ref[...].astype(jnp.float32)
    for i in range(num_hidden):
        w = wb[2 * i][...]
        b = wb[2 * i + 1][...]
        x = jnp.dot(x, w, preferred_element_type=jnp.float32) + b
        x = jnp.maximum(x, 0.0)
        # dropout (eval mode) -> identity
    w_out = wb[-2][...]
    b_out = wb[-1][...]
    y = jnp.dot(x, w_out, preferred_element_type=jnp.float32) + b_out
    o_ref[...] = y.astype(o_ref.dtype)


def network_forward(x, params):
    """Forward pass of the whole network in one fused Pallas kernel.

    x:      (batch, input_size) f32
    params: list of (w, b) with w (in, out) [pre-transposed vs. PyTorch] and
            b (1, out); last entry is the output layer.
    """
    batch, in_features = x.shape
    out_features = params[-1][0].shape[1]
    num_hidden = len(params) - 1

    # --- pad to lane/sublane-dense shapes (exact: zero padding contributes 0)
    sizes = [in_features] + [w.shape[1] for w, _ in params]
    sizes_pad = [_round_up(s, LANE) for s in sizes]

    tb = min(_round_up(batch, SUBLANE), 512)      # batch rows per grid step
    b_pad = _round_up(batch, tb)

    x_p = _pad2(x, b_pad, sizes_pad[0])
    padded = []
    for (w, b), fi, fo in zip(params, sizes_pad[:-1], sizes_pad[1:]):
        padded.append(_pad2(w, fi, fo))
        padded.append(_pad2(b, 1, fo))

    # --- block specs: batch-tiled activations, grid-invariant (resident) params
    in_specs = [pl.BlockSpec((tb, sizes_pad[0]), lambda i: (i, 0))]
    for p in padded:
        in_specs.append(pl.BlockSpec(p.shape, lambda i: (0, 0)))
    out_specs = pl.BlockSpec((tb, sizes_pad[-1]), lambda i: (i, 0))

    flops = 2 * b_pad * sum(fi * fo for fi, fo in zip(sizes_pad[:-1], sizes_pad[1:]))
    bytes_accessed = 4 * (x_p.size + sum(p.size for p in padded)
                          + b_pad * sizes_pad[-1])
    cost = pl.CostEstimate(flops=flops, transcendentals=0,
                           bytes_accessed=bytes_accessed)

    kernel = functools.partial(_mlp_kernel, num_hidden=num_hidden)
    out_p = pl.pallas_call(
        kernel,
        out_shape=jax.ShapeDtypeStruct((b_pad, sizes_pad[-1]), x.dtype),
        grid=(b_pad // tb,),
        in_specs=in_specs,
        out_specs=out_specs,
        compiler_params=pltpu.CompilerParams(
            dimension_semantics=("parallel",)
        ),
        cost_estimate=cost,
    )(x_p, *padded)

    return out_p[:batch, :out_features]


def init_network_params(key, input_size, output_size, hidden_layers):
    """Deterministic parameters matching nn.Linear shapes.

    PyTorch stores Linear weight as (out, in); we store the transpose
    (in, out) so the kernel computes x @ W + b.
    """
    sizes = [input_size] + list(hidden_layers) + [output_size]
    params = []
    for fan_in, fan_out in zip(sizes[:-1], sizes[1:]):
        key, wk, bk = jax.random.split(key, 3)
        bound = 1.0 / jnp.sqrt(fan_in)
        w = jax.random.uniform(
            wk, (fan_in, fan_out), jnp.float32, -bound, bound
        )
        b = jax.random.uniform(bk, (1, fan_out), jnp.float32, -bound, bound)
        params.append((w, b))
    return params


if __name__ == "__main__":
    key = jax.random.PRNGKey(0)

    batch = 4
    input_size = 32
    hidden_layers = [64, 32]
    output_size = 10

    key, pk, xk = jax.random.split(key, 3)
    params = init_network_params(pk, input_size, output_size, hidden_layers)
    x = jax.random.normal(xk, (batch, input_size), jnp.float32)

    logits = jax.jit(network_forward)(x, params)
    jax.block_until_ready(logits)

    assert logits.shape == (batch, output_size), logits.shape
    assert logits.dtype == jnp.float32

    # Sanity check against a plain-JAX reference of the same math.
    ref = x
    for w, b in params[:-1]:
        ref = jnp.maximum(ref @ w + b, 0.0)
    ref = ref @ params[-1][0] + params[-1][1]
    assert jnp.allclose(logits, ref, atol=1e-4, rtol=1e-4), (
        float(jnp.max(jnp.abs(logits - ref))))

    print("KERNEL_OK")
</pallas_src>

<mosaic_0001>
module attributes {stable_mosaic.version = 11 : i64} {
  func.func @_mlp_kernel(%arg0: i32, %arg1: memref<8x128xf32, #tpu.memory_space<vmem>>, %arg2: memref<128x128xf32, #tpu.memory_space<vmem>>, %arg3: memref<1x128xf32, #tpu.memory_space<vmem>>, %arg4: memref<128x128xf32, #tpu.memory_space<vmem>>, %arg5: memref<1x128xf32, #tpu.memory_space<vmem>>, %arg6: memref<128x128xf32, #tpu.memory_space<vmem>>, %arg7: memref<1x128xf32, #tpu.memory_space<vmem>>, %arg8: memref<8x128xf32, #tpu.memory_space<vmem>>) attributes {dimension_semantics = [#tpu.dimension_semantics<parallel>], iteration_bounds = array<i64: 1>, scalar_prefetch = 0 : i64, scratch_operands = 0 : i64, tpu.core_type = #tpu.core_type<tc>, window_params = [{transform_indices = @transform_0, window_bounds = array<i64: 8, 128>}, {pipeline_mode = #tpu.pipeline_mode<synchronous>, transform_indices = @transform_1, window_bounds = array<i64: 128, 128>}, {pipeline_mode = #tpu.pipeline_mode<synchronous>, transform_indices = @transform_2, window_bounds = array<i64: 1, 128>}, {pipeline_mode = #tpu.pipeline_mode<synchronous>, transform_indices = @transform_3, window_bounds = array<i64: 128, 128>}, {pipeline_mode = #tpu.pipeline_mode<synchronous>, transform_indices = @transform_4, window_bounds = array<i64: 1, 128>}, {pipeline_mode = #tpu.pipeline_mode<synchronous>, transform_indices = @transform_5, window_bounds = array<i64: 128, 128>}, {pipeline_mode = #tpu.pipeline_mode<synchronous>, transform_indices = @transform_6, window_bounds = array<i64: 1, 128>}, {transform_indices = @transform_7, window_bounds = array<i64: 8, 128>}]} {
    %c0 = arith.constant 0 : index
    %c0_0 = arith.constant 0 : index
    %0 = vector.load %arg1[%c0, %c0_0] : memref<8x128xf32, #tpu.memory_space<vmem>>, vector<8x128xf32>
    %c0_1 = arith.constant 0 : index
    %c0_2 = arith.constant 0 : index
    %1 = vector.load %arg2[%c0_1, %c0_2] : memref<128x128xf32, #tpu.memory_space<vmem>>, vector<128x128xf32>
    %c0_3 = arith.constant 0 : index
    %c0_4 = arith.constant 0 : index
    %2 = vector.load %arg3[%c0_3, %c0_4] : memref<1x128xf32, #tpu.memory_space<vmem>>, vector<1x128xf32>
    %cst = arith.constant dense<0.000000e+00> : vector<8x128xf32>
    %3 = tpu.matmul %0, %1, %cst {dimension_numbers = #tpu.dot_dimension_numbers<[1], [0], [0], [1], [0, 0, 1, 1], [], []>} : vector<8x128xf32>, vector<128x128xf32>, vector<8x128xf32> -> vector<8x128xf32>
    %4 = vector.broadcast %2 : vector<1x128xf32> to vector<8x128xf32>
    %5 = arith.addf %3, %4 : vector<8x128xf32>
    %cst_5 = arith.constant 0.000000e+00 : f32
    %6 = vector.broadcast %cst_5 : f32 to vector<8x128xf32>
    %7 = arith.maximumf %5, %6 : vector<8x128xf32>
    %c0_6 = arith.constant 0 : index
    %c0_7 = arith.constant 0 : index
    %8 = vector.load %arg4[%c0_6, %c0_7] : memref<128x128xf32, #tpu.memory_space<vmem>>, vector<128x128xf32>
    %c0_8 = arith.constant 0 : index
    %c0_9 = arith.constant 0 : index
    %9 = vector.load %arg5[%c0_8, %c0_9] : memref<1x128xf32, #tpu.memory_space<vmem>>, vector<1x128xf32>
    %cst_10 = arith.constant dense<0.000000e+00> : vector<8x128xf32>
    %10 = tpu.matmul %7, %8, %cst_10 {dimension_numbers = #tpu.dot_dimension_numbers<[1], [0], [0], [1], [0, 0, 1, 1], [], []>} : vector<8x128xf32>, vector<128x128xf32>, vector<8x128xf32> -> vector<8x128xf32>
    %11 = vector.broadcast %9 : vector<1x128xf32> to vector<8x128xf32>
    %12 = arith.addf %10, %11 : vector<8x128xf32>
    %cst_11 = arith.constant 0.000000e+00 : f32
    %13 = vector.broadcast %cst_11 : f32 to vector<8x128xf32>
    %14 = arith.maximumf %12, %13 : vector<8x128xf32>
    %c0_12 = arith.constant 0 : index
    %c0_13 = arith.constant 0 : index
    %15 = vector.load %arg6[%c0_12, %c0_13] : memref<128x128xf32, #tpu.memory_space<vmem>>, vector<128x128xf32>
    %c0_14 = arith.constant 0 : index
    %c0_15 = arith.constant 0 : index
    %16 = vector.load %arg7[%c0_14, %c0_15] : memref<1x128xf32, #tpu.memory_space<vmem>>, vector<1x128xf32>
    %cst_16 = arith.constant dense<0.000000e+00> : vector<8x128xf32>
    %17 = tpu.matmul %14, %15, %cst_16 {dimension_numbers = #tpu.dot_dimension_numbers<[1], [0], [0], [1], [0, 0, 1, 1], [], []>} : vector<8x128xf32>, vector<128x128xf32>, vector<8x128xf32> -> vector<8x128xf32>
    %18 = vector.broadcast %16 : vector<1x128xf32> to vector<8x128xf32>
    %19 = arith.addf %17, %18 : vector<8x128xf32>
    %c0_17 = arith.constant 0 : index
    %c0_18 = arith.constant 0 : index
    %20 = vector.load %arg8[%c0_17, %c0_18] : memref<8x128xf32, #tpu.memory_space<vmem>>, vector<8x128xf32>
    tpu.vector_store %arg8[%c0_17, %c0_18], %19 {strides = array<i32>} : memref<8x128xf32, #tpu.memory_space<vmem>>, vector<8x128xf32>,
    return
  }
  func.func @transform_0(%arg0: i32) -> (i32, i32) {
    %c0_i32 = arith.constant 0 : i32
    %c0_i32_0 = arith.constant 0 : i32
    return %arg0, %c0_i32 : i32, i32
  }
  func.func @transform_1(%arg0: i32) -> (i32, i32) {
    %c0_i32 = arith.constant 0 : i32
    %c0_i32_0 = arith.constant 0 : i32
    %c0_i32_1 = arith.constant 0 : i32
    return %c0_i32, %c0_i32_0 : i32, i32
  }
  func.func @transform_2(%arg0: i32) -> (i32, i32) {
    %c0_i32 = arith.constant 0 : i32
    %c0_i32_0 = arith.constant 0 : i32
    %c0_i32_1 = arith.constant 0 : i32
    return %c0_i32, %c0_i32_0 : i32, i32
  }
  func.func @transform_3(%arg0: i32) -> (i32, i32) {
    %c0_i32 = arith.constant 0 : i32
    %c0_i32_0 = arith.constant 0 : i32
    %c0_i32_1 = arith.constant 0 : i32
    return %c0_i32, %c0_i32_0 : i32, i32
  }
  func.func @transform_4(%arg0: i32) -> (i32, i32) {
    %c0_i32 = arith.constant 0 : i32
    %c0_i32_0 = arith.constant 0 : i32
    %c0_i32_1 = arith.constant 0 : i32
    return %c0_i32, %c0_i32_0 : i32, i32
  }
  func.func @transform_5(%arg0: i32) -> (i32, i32) {
    %c0_i32 = arith.constant 0 : i32
    %c0_i32_0 = arith.constant 0 : i32
    %c0_i32_1 = arith.constant 0 : i32
    return %c0_i32, %c0_i32_0 : i32, i32
  }
  func.func @transform_6(%arg0: i32) -> (i32, i32) {
    %c0_i32 = arith.constant 0 : i32
    %c0_i32_0 = arith.constant 0 : i32
    %c0_i32_1 = arith.constant 0 : i32
    return %c0_i32, %c0_i32_0 : i32, i32
  }
  func.func @transform_7(%arg0: i32) -> (i32, i32) {
    %c0_i32 = arith.constant 0 : i32
    %c0_i32_0 = arith.constant 0 : i32
    return %arg0, %c0_i32 : i32, i32
  }
}

</mosaic_0001>

<llo_original>
// kernel: network_forward.1
$region0: #{network_forward.1}
  #allocation0 [shape = 'u32[]', space=smem, size = 0x4, offset = 0x4, fixed_abs, tag = 'smem constant byte address 0x4 - core index']
  #allocation1 [shape = 'u32[72,128]{1,0:T(1,128)}', space=vmem, size = 0x9000, scoped, tag = 'internal scratch']
  %s0 = inlined_call_operand.vmem [shape: f32[8,128], index: 0, kind: input, shape index: {}]
  %s1 = inlined_call_operand.vmem [shape: f32[128,128], index: 1, kind: input, shape index: {}]
  %s2 = inlined_call_operand.vmem [shape: f32[1,128], index: 2, kind: input, shape index: {}]
  %s3 = inlined_call_operand.vmem [shape: f32[128,128], index: 3, kind: input, shape index: {}]
  %s4 = inlined_call_operand.vmem [shape: f32[1,128], index: 4, kind: input, shape index: {}]
  %s5 = inlined_call_operand.vmem [shape: f32[128,128], index: 5, kind: input, shape index: {}]
  %s6 = inlined_call_operand.vmem [shape: f32[1,128], index: 6, kind: input, shape index: {}]
  %s7 = inlined_call_operand.vmem [shape: f32[8,128], index: 7, kind: output, shape index: {}]
  %s8 = sld [smem:[#allocation0]]
  $region38: #{network_forward.1} parent=0
    _
  %s10 = ssub.s32 1, %s8
  %s11 = scalar_select 0, %s10, %s8
  // Predicated region
  $region2: #{network_forward.1} parent=0 // pred_check
    _
  $region3: #{network_forward.1} parent=0 // pred_check_branch
    %13 = sbr.rel (0) target = $region5
  $region4: #{network_forward.1} parent=0 // pred_region
    _
  $region5: #{network_forward.1} parent=0 // pred_fallthru
    _
  // Predicated region
  $region6: #{network_forward.1} parent=0 // pred_check
    _
  $region7: #{network_forward.1} parent=0 // pred_check_branch
    %15 = sbr.rel (0) target = $region9
  $region8: #{network_forward.1} parent=0 // pred_region
    _
  $region9: #{network_forward.1} parent=0 // pred_fallthru
    _
  // Predicated region
  $region10: #{network_forward.1} parent=0 // pred_check
    _
  $region11: #{network_forward.1} parent=0 // pred_check_branch
    %17 = sbr.rel (0) target = $region13
  $region12: #{network_forward.1} parent=0 // pred_region
    _
  $region13: #{network_forward.1} parent=0 // pred_fallthru
    _
  // Predicated region
  $region14: #{network_forward.1} parent=0 // pred_check
    _
  $region15: #{network_forward.1} parent=0 // pred_check_branch
    %19 = sbr.rel (0) target = $region17
  $region16: #{network_forward.1} parent=0 // pred_region
    _
  $region17: #{network_forward.1} parent=0 // pred_fallthru
    _
  // Predicated region
  $region18: #{network_forward.1} parent=0 // pred_check
    _
  $region19: #{network_forward.1} parent=0 // pred_check_branch
    %21 = sbr.rel (0) target = $region21
  $region20: #{network_forward.1} parent=0 // pred_region
    _
  $region21: #{network_forward.1} parent=0 // pred_fallthru
    _
  // Predicated region
  $region22: #{network_forward.1} parent=0 // pred_check
    _
  $region23: #{network_forward.1} parent=0 // pred_check_branch
    %23 = sbr.rel (0) target = $region25
  $region24: #{network_forward.1} parent=0 // pred_region
    _
  $region25: #{network_forward.1} parent=0 // pred_fallthru
    _
  // Predicated region
  $region26: #{network_forward.1} parent=0 // pred_check
    _
  $region27: #{network_forward.1} parent=0 // pred_check_branch
    %25 = sbr.rel (0) target = $region29
  $region28: #{network_forward.1} parent=0 // pred_region
    _
  $region29: #{network_forward.1} parent=0 // pred_fallthru
    _
  %v26 = vld [vmem:[%s0] sm:$0xff]
  %v27 = vld [vmem:[%s1] sm:$0xff]
  %v28 = vld [vmem:[%s1 + $0x8] sm:$0xff]
  %v29 = vld [vmem:[%s1 + $0x10] sm:$0xff]
  %v30 = vld [vmem:[%s1 + $0x18] sm:$0xff]
  %v31 = vld [vmem:[%s1 + $0x20] sm:$0xff]
  %v32 = vld [vmem:[%s1 + $0x28] sm:$0xff]
  %v33 = vld [vmem:[%s1 + $0x30] sm:$0xff]
  %v34 = vld [vmem:[%s1 + $0x38] sm:$0xff]
  %v35 = vld [vmem:[%s1 + $0x40] sm:$0xff]
  %v36 = vld [vmem:[%s1 + $0x48] sm:$0xff]
  %v37 = vld [vmem:[%s1 + $0x50] sm:$0xff]
  %v38 = vld [vmem:[%s1 + $0x58] sm:$0xff]
  %v39 = vld [vmem:[%s1 + $0x60] sm:$0xff]
  %v40 = vld [vmem:[%s1 + $0x68] sm:$0xff]
  %v41 = vld [vmem:[%s1 + $0x70] sm:$0xff]
  %v42 = vld [vmem:[%s1 + $0x78] sm:$0xff]
  %v43 = vld [vmem:[%s2] sm:$0x1]
  %v45 = vperm.slane %v43, 0
  %47 = vmatpush.msra.mxu0 %v42
  %48 = vmatpush.msra.mxu0 %v41
  %49 = vmatpush.msra.mxu0 %v40
  %50 = vmatpush.msra.mxu0 %v39
  %51 = vmatpush.msra.mxu0 %v38
  %52 = vmatpush.msra.mxu0 %v37
  %53 = vmatpush.msra.mxu0 %v36
  %54 = vmatpush.msra.mxu0 %v35
  %55 = vmatpush.msra.mxu0 %v34
  %56 = vmatpush.msra.mxu0 %v33
  %57 = vmatpush.msra.mxu0 %v32
  %58 = vmatpush.msra.mxu0 %v31
  %59 = vmatpush.msra.mxu0 %v30
  %60 = vmatpush.msra.mxu0 %v29
  %61 = vmatpush.msra.mxu0 %v28
  %62 = vmatpush.msra.mxu0 %v27
  %63 = vmatmul.f32.gmra.mxu0 %v26
  %v64 = vpop.f32.mrf.mxu0
  %v65 = vadd.f32 %v45, %v64
  %66 = vdwg.mxu0
  %v67 = vmax.f32 %v65, 0.0
  %v68 = vld [vmem:[%s3] sm:$0xff]
  %v69 = vld [vmem:[%s3 + $0x8] sm:$0xff]
  %v70 = vld [vmem:[%s3 + $0x10] sm:$0xff]
  %v71 = vld [vmem:[%s3 + $0x18] sm:$0xff]
  %v72 = vld [vmem:[%s3 + $0x20] sm:$0xff]
  %v73 = vld [vmem:[%s3 + $0x28] sm:$0xff]
  %v74 = vld [vmem:[%s3 + $0x30] sm:$0xff]
  %v75 = vld [vmem:[%s3 + $0x38] sm:$0xff]
  %v76 = vld [vmem:[%s3 + $0x40] sm:$0xff]
  %v77 = vld [vmem:[%s3 + $0x48] sm:$0xff]
  %v78 = vld [vmem:[%s3 + $0x50] sm:$0xff]
  %v79 = vld [vmem:[%s3 + $0x58] sm:$0xff]
  %v80 = vld [vmem:[%s3 + $0x60] sm:$0xff]
  %v81 = vld [vmem:[%s3 + $0x68] sm:$0xff]
  %v82 = vld [vmem:[%s3 + $0x70] sm:$0xff]
  %v83 = vld [vmem:[%s3 + $0x78] sm:$0xff]
  %v84 = vld [vmem:[%s4] sm:$0x1]
  %v86 = vperm.slane %v84, 0
  %88 = vmatpush.msra.mxu0 %v83
  %89 = vmatpush.msra.mxu0 %v82
  %90 = vmatpush.msra.mxu0 %v81
  %91 = vmatpush.msra.mxu0 %v80
  %92 = vmatpush.msra.mxu0 %v79
  %93 = vmatpush.msra.mxu0 %v78
  %94 = vmatpush.msra.mxu0 %v77
  %95 = vmatpush.msra.mxu0 %v76
  %96 = vmatpush.msra.mxu0 %v75
  %97 = vmatpush.msra.mxu0 %v74
  %98 = vmatpush.msra.mxu0 %v73
  %99 = vmatpush.msra.mxu0 %v72
  %100 = vmatpush.msra.mxu0 %v71
  %101 = vmatpush.msra.mxu0 %v70
  %102 = vmatpush.msra.mxu0 %v69
  %103 = vmatpush.msra.mxu0 %v68
  %104 = vmatmul.f32.gmra.mxu0 %v67
  %v105 = vpop.f32.mrf.mxu0
  %v106 = vadd.f32 %v86, %v105
  %107 = vdwg.mxu0
  %v108 = vmax.f32 %v106, 0.0
  %v109 = vld [vmem:[%s5] sm:$0xff]
  %v110 = vld [vmem:[%s5 + $0x8] sm:$0xff]
  %v111 = vld [vmem:[%s5 + $0x10] sm:$0xff]
  %v112 = vld [vmem:[%s5 + $0x18] sm:$0xff]
  %v113 = vld [vmem:[%s5 + $0x20] sm:$0xff]
  %v114 = vld [vmem:[%s5 + $0x28] sm:$0xff]
  %v115 = vld [vmem:[%s5 + $0x30] sm:$0xff]
  %v116 = vld [vmem:[%s5 + $0x38] sm:$0xff]
  %v117 = vld [vmem:[%s5 + $0x40] sm:$0xff]
  %v118 = vld [vmem:[%s5 + $0x48] sm:$0xff]
  %v119 = vld [vmem:[%s5 + $0x50] sm:$0xff]
  %v120 = vld [vmem:[%s5 + $0x58] sm:$0xff]
  %v121 = vld [vmem:[%s5 + $0x60] sm:$0xff]
  %v122 = vld [vmem:[%s5 + $0x68] sm:$0xff]
  %v123 = vld [vmem:[%s5 + $0x70] sm:$0xff]
  %v124 = vld [vmem:[%s5 + $0x78] sm:$0xff]
  %v125 = vld [vmem:[%s6] sm:$0x1]
  %v127 = vperm.slane %v125, 0
  %129 = vmatpush.msra.mxu0 %v124
  %130 = vmatpush.msra.mxu0 %v123
  %131 = vmatpush.msra.mxu0 %v122
  %132 = vmatpush.msra.mxu0 %v121
  %133 = vmatpush.msra.mxu0 %v120
  %134 = vmatpush.msra.mxu0 %v119
  %135 = vmatpush.msra.mxu0 %v118
  %136 = vmatpush.msra.mxu0 %v117
  %137 = vmatpush.msra.mxu0 %v116
  %138 = vmatpush.msra.mxu0 %v115
  %139 = vmatpush.msra.mxu0 %v114
  %140 = vmatpush.msra.mxu0 %v113
  %141 = vmatpush.msra.mxu0 %v112
  %142 = vmatpush.msra.mxu0 %v111
  %143 = vmatpush.msra.mxu0 %v110
  %144 = vmatpush.msra.mxu0 %v109
  %145 = vmatmul.f32.gmra.mxu0 %v108
  %v146 = vpop.f32.mrf.mxu0
  %v147 = vadd.f32 %v127, %v146
  %148 = vdwg.mxu0
  %149 = vst [vmem:[%s7] sm:$0xff] %v147
  // Predicated region
  $region30: #{network_forward.1} parent=0 // pred_check
    _
  $region31: #{network_forward.1} parent=0 // pred_check_branch
    %151 = sbr.rel (0) target = $region33
  $region32: #{network_forward.1} parent=0 // pred_region
    _
  $region33: #{network_forward.1} parent=0 // pred_fallthru
    _
  // Predicated region
  $region34: #{network_forward.1} parent=0 // pred_check
    _
  $region35: #{network_forward.1} parent=0 // pred_check_branch
    %153 = sbr.rel (0) target = $region37
  $region36: #{network_forward.1} parent=0 // pred_region
    _
  $region37: #{network_forward.1} parent=0 // pred_fallthru
    _

</llo_original>
